<compile_context>
chip_gen: v5e
topology: v5e:2x2
jax: 0.10.0
libtpu: 0.0.40
codegen_flags: <defaults>
</compile_context>

<pallas_src>
import math
from functools import partial

import jax
import jax.numpy as jnp
from jax.experimental import pallas as pl
from jax.experimental.pallas import tpu as pltpu


# ----------------------------------------------------------------------------
# Fused FFN kernel: y = relu(relu(x @ W1t + b1) @ W2t + b2)  on one row-tile
# ----------------------------------------------------------------------------
def ffn_kernel(x_ref, w1_ref, b1_ref, w2_ref, b2_ref, o_ref):
    x = x_ref[...]                                                       # [tm, Din]
    h = jnp.dot(x, w1_ref[...], preferred_element_type=jnp.float32)     # [tm, F]
    h = jnp.maximum(h + b1_ref[...], 0.0)                               # bias + ReLU (layer 0)
    y = jnp.dot(h, w2_ref[...], preferred_element_type=jnp.float32)     # [tm, Dout]
    y = jnp.maximum(y + b2_ref[...], 0.0)                               # bias + ReLU (layer 1, matches torch forward)
    o_ref[...] = y.astype(o_ref.dtype)


@partial(jax.jit, static_argnames=("tm",))
def ffn_forward(x2d, w1t, b1r, w2t, b2r, *, tm=512):
    """x2d: [N, Din]; w1t: [Din, F]; b1r: [1, F]; w2t: [F, Dout]; b2r: [1, Dout].

    Returns [N, Dout] = relu(relu(x2d @ w1t + b1) @ w2t + b2).
    """
    N, Din = x2d.shape
    F = w1t.shape[1]
    Dout = w2t.shape[1]

    # Row tile: multiple of 8 (sublane), clamped to the (8-padded) row count.
    n_pad8 = ((N + 7) // 8) * 8
    tm = min(tm, n_pad8)
    Np = ((N + tm - 1) // tm) * tm
    if Np != N:
        x2d = jnp.pad(x2d, ((0, Np - N), (0, 0)))

    grid = (pl.cdiv(Np, tm),)

    out = pl.pallas_call(
        ffn_kernel,
        out_shape=jax.ShapeDtypeStruct((Np, Dout), jnp.float32),
        grid_spec=pltpu.PrefetchScalarGridSpec(
            num_scalar_prefetch=0,
            grid=grid,
            in_specs=[
                pl.BlockSpec((tm, Din), lambda i: (i, 0)),      # x: tiled over rows
                pl.BlockSpec((Din, F), lambda i: (0, 0)),       # W1t: VMEM-resident
                pl.BlockSpec((1, F), lambda i: (0, 0)),         # b1:  VMEM-resident
                pl.BlockSpec((F, Dout), lambda i: (0, 0)),      # W2t: VMEM-resident
                pl.BlockSpec((1, Dout), lambda i: (0, 0)),      # b2:  VMEM-resident
            ],
            out_specs=pl.BlockSpec((tm, Dout), lambda i: (i, 0)),
        ),
        compiler_params=pltpu.CompilerParams(
            dimension_semantics=("parallel",),
            vmem_limit_bytes=48 * 1024 * 1024,
        ),
    )(x2d, w1t, b1r, w2t, b2r)

    if Np != N:
        out = out[:N]
    return out


# ----------------------------------------------------------------------------
# Module wrapper (mirrors PyTorch PositionwiseFeedForward, layer_config='ll')
# ----------------------------------------------------------------------------
class PositionwiseFeedForwardPallas:
    def __init__(self, input_depth, filter_size, output_depth, key,
                 layer_config="ll", dropout=0.0):
        if layer_config != "ll":
            raise NotImplementedError("Only the default 'll' config is implemented.")
        assert dropout == 0.0, "eval-mode only (dropout is identity)"
        k1, k2, k3, k4 = jax.random.split(key, 4)

        def init_linear(kw, kb, fan_in, fan_out):
            bound = 1.0 / math.sqrt(fan_in)
            w = jax.random.uniform(kw, (fan_out, fan_in), jnp.float32, -bound, bound)
            b = jax.random.uniform(kb, (fan_out,), jnp.float32, -bound, bound)
            return w, b

        # torch Linear layout: weight [out, in]; keep both the torch layout
        # (for the reference) and the pre-transposed [in, out] copy (for MXU).
        self.w1, self.b1 = init_linear(k1, k2, input_depth, filter_size)
        self.w2, self.b2 = init_linear(k3, k4, filter_size, output_depth)
        self.w1t = jnp.asarray(self.w1.T)                 # [Din, F]   one-time transpose
        self.w2t = jnp.asarray(self.w2.T)                 # [F, Dout]
        self.b1r = jnp.asarray(self.b1).reshape(1, -1)    # [1, F]     one-time reshape
        self.b2r = jnp.asarray(self.b2).reshape(1, -1)    # [1, Dout]
        self.output_depth = output_depth

    def __call__(self, inputs):
        # inputs: [B, S, input_depth]
        B, S, Din = inputs.shape
        y = ffn_forward(inputs.reshape(B * S, Din),
                        self.w1t, self.b1r, self.w2t, self.b2r)
        return y.reshape(B, S, self.output_depth)


# ----------------------------------------------------------------------------
# Pure-JAX reference (same math as the PyTorch forward)
# ----------------------------------------------------------------------------
def reference(mod, inputs):
    x = inputs
    x = jnp.maximum(x @ mod.w1.T + mod.b1, 0.0)   # layer 0 + ReLU
    x = jnp.maximum(x @ mod.w2.T + mod.b2, 0.0)   # layer 1 + ReLU (always applied)
    return x


if __name__ == "__main__":
    B, S = 2, 8
    INPUT_DEPTH, FILTER_SIZE, OUTPUT_DEPTH = 32, 64, 32

    root = jax.random.PRNGKey(0)
    kp, kx = jax.random.split(root, 2)

    mod = PositionwiseFeedForwardPallas(INPUT_DEPTH, FILTER_SIZE, OUTPUT_DEPTH, kp)
    x = jax.random.normal(kx, (B, S, INPUT_DEPTH), jnp.float32)

    out = mod(x)
    out = jax.block_until_ready(out)

    ref = reference(mod, x)
    assert out.shape == (B, S, OUTPUT_DEPTH)
    assert jnp.allclose(out, ref, atol=1e-5, rtol=1e-5), "mismatch vs reference"

    print("KERNEL_OK")
</pallas_src>

<mosaic_0001>
module attributes {stable_mosaic.version = 11 : i64} {
  func.func @ffn_kernel(%arg0: i32, %arg1: memref<16x32xf32, #tpu.memory_space<vmem>>, %arg2: memref<32x64xf32, #tpu.memory_space<vmem>>, %arg3: memref<1x64xf32, #tpu.memory_space<vmem>>, %arg4: memref<64x32xf32, #tpu.memory_space<vmem>>, %arg5: memref<1x32xf32, #tpu.memory_space<vmem>>, %arg6: memref<16x32xf32, #tpu.memory_space<vmem>>) attributes {dimension_semantics = [#tpu.dimension_semantics<parallel>], iteration_bounds = array<i64: 1>, scalar_prefetch = 0 : i64, scratch_operands = 0 : i64, tpu.core_type = #tpu.core_type<tc>, window_params = [{transform_indices = @transform_0, window_bounds = array<i64: 16, 32>}, {pipeline_mode = #tpu.pipeline_mode<synchronous>, transform_indices = @transform_1, window_bounds = array<i64: 32, 64>}, {pipeline_mode = #tpu.pipeline_mode<synchronous>, transform_indices = @transform_2, window_bounds = array<i64: 1, 64>}, {pipeline_mode = #tpu.pipeline_mode<synchronous>, transform_indices = @transform_3, window_bounds = array<i64: 64, 32>}, {pipeline_mode = #tpu.pipeline_mode<synchronous>, transform_indices = @transform_4, window_bounds = array<i64: 1, 32>}, {transform_indices = @transform_5, window_bounds = array<i64: 16, 32>}]} {
    %c0 = arith.constant 0 : index
    %c0_0 = arith.constant 0 : index
    %0 = vector.load %arg1[%c0, %c0_0] : memref<16x32xf32, #tpu.memory_space<vmem>>, vector<16x32xf32>
    %c0_1 = arith.constant 0 : index
    %c0_2 = arith.constant 0 : index
    %1 = vector.load %arg2[%c0_1, %c0_2] : memref<32x64xf32, #tpu.memory_space<vmem>>, vector<32x64xf32>
    %cst = arith.constant dense<0.000000e+00> : vector<16x64xf32>
    %2 = tpu.matmul %0, %1, %cst {dimension_numbers = #tpu.dot_dimension_numbers<[1], [0], [0], [1], [0, 0, 1, 1], [], []>} : vector<16x32xf32>, vector<32x64xf32>, vector<16x64xf32> -> vector<16x64xf32>
    %c0_3 = arith.constant 0 : index
    %c0_4 = arith.constant 0 : index
    %3 = vector.load %arg3[%c0_3, %c0_4] : memref<1x64xf32, #tpu.memory_space<vmem>>, vector<1x64xf32>
    %4 = vector.broadcast %3 : vector<1x64xf32> to vector<16x64xf32>
    %5 = arith.addf %2, %4 : vector<16x64xf32>
    %cst_5 = arith.constant 0.000000e+00 : f32
    %6 = vector.broadcast %cst_5 : f32 to vector<16x64xf32>
    %7 = arith.maximumf %5, %6 : vector<16x64xf32>
    %c0_6 = arith.constant 0 : index
    %c0_7 = arith.constant 0 : index
    %8 = vector.load %arg4[%c0_6, %c0_7] : memref<64x32xf32, #tpu.memory_space<vmem>>, vector<64x32xf32>
    %cst_8 = arith.constant dense<0.000000e+00> : vector<16x32xf32>
    %9 = tpu.matmul %7, %8, %cst_8 {dimension_numbers = #tpu.dot_dimension_numbers<[1], [0], [0], [1], [0, 0, 1, 1], [], []>} : vector<16x64xf32>, vector<64x32xf32>, vector<16x32xf32> -> vector<16x32xf32>
    %c0_9 = arith.constant 0 : index
    %c0_10 = arith.constant 0 : index
    %10 = vector.load %arg5[%c0_9, %c0_10] : memref<1x32xf32, #tpu.memory_space<vmem>>, vector<1x32xf32>
    %11 = vector.broadcast %10 : vector<1x32xf32> to vector<16x32xf32>
    %12 = arith.addf %9, %11 : vector<16x32xf32>
    %cst_11 = arith.constant 0.000000e+00 : f32
    %13 = vector.broadcast %cst_11 : f32 to vector<16x32xf32>
    %14 = arith.maximumf %12, %13 : vector<16x32xf32>
    %c0_12 = arith.constant 0 : index
    %c0_13 = arith.constant 0 : index
    %15 = vector.load %arg6[%c0_12, %c0_13] : memref<16x32xf32, #tpu.memory_space<vmem>>, vector<16x32xf32>
    tpu.vector_store %arg6[%c0_12, %c0_13], %14 {strides = array<i32>} : memref<16x32xf32, #tpu.memory_space<vmem>>, vector<16x32xf32>,
    return
  }
  func.func @transform_0(%arg0: i32) -> (i32, i32) {
    %c0_i32 = arith.constant 0 : i32
    %c0_i32_0 = arith.constant 0 : i32
    return %arg0, %c0_i32 : i32, i32
  }
  func.func @transform_1(%arg0: i32) -> (i32, i32) {
    %c0_i32 = arith.constant 0 : i32
    %c0_i32_0 = arith.constant 0 : i32
    %c0_i32_1 = arith.constant 0 : i32
    return %c0_i32, %c0_i32_0 : i32, i32
  }
  func.func @transform_2(%arg0: i32) -> (i32, i32) {
    %c0_i32 = arith.constant 0 : i32
    %c0_i32_0 = arith.constant 0 : i32
    %c0_i32_1 = arith.constant 0 : i32
    return %c0_i32, %c0_i32_0 : i32, i32
  }
  func.func @transform_3(%arg0: i32) -> (i32, i32) {
    %c0_i32 = arith.constant 0 : i32
    %c0_i32_0 = arith.constant 0 : i32
    %c0_i32_1 = arith.constant 0 : i32
    return %c0_i32, %c0_i32_0 : i32, i32
  }
  func.func @transform_4(%arg0: i32) -> (i32, i32) {
    %c0_i32 = arith.constant 0 : i32
    %c0_i32_0 = arith.constant 0 : i32
    %c0_i32_1 = arith.constant 0 : i32
    return %c0_i32, %c0_i32_0 : i32, i32
  }
  func.func @transform_5(%arg0: i32) -> (i32, i32) {
    %c0_i32 = arith.constant 0 : i32
    %c0_i32_0 = arith.constant 0 : i32
    return %arg0, %c0_i32 : i32, i32
  }
}

</mosaic_0001>

<llo_original>
// kernel: ffn_forward.1
$region0: #{ffn_forward.1}
  #allocation0 [shape = 'u32[]', space=smem, size = 0x4, offset = 0x4, fixed_abs, tag = 'smem constant byte address 0x4 - core index']
  #allocation1 [shape = 'u32[72,128]{1,0:T(1,128)}', space=vmem, size = 0x9000, scoped, tag = 'internal scratch']
  %s0 = inlined_call_operand.vmem [shape: f32[16,32], index: 0, kind: input, shape index: {}]
  %s1 = inlined_call_operand.vmem [shape: f32[32,64], index: 1, kind: input, shape index: {}]
  %s2 = inlined_call_operand.vmem [shape: f32[1,64], index: 2, kind: input, shape index: {}]
  %s3 = inlined_call_operand.vmem [shape: f32[64,32], index: 3, kind: input, shape index: {}]
  %s4 = inlined_call_operand.vmem [shape: f32[1,32], index: 4, kind: input, shape index: {}]
  %s5 = inlined_call_operand.hbm [shape: f32[16,32], index: 5, kind: output, shape index: {}]
  %s6 = sld [smem:[#allocation0]]
  $region30: #{ffn_forward.1} parent=0
    _
  %s8 = ssub.s32 1, %s6
  %s9 = scalar_select 0, %s8, %s6
  $region1: #{ffn_forward.1} parent=0
    #allocation2 [shape = 'u8[8192]{0}', space=vmem, size = 0x2000, scoped, tag = 'output window, operand 0, single buffered']
    #allocation3 [shape = 's32[1]{0}', space=sflag, size = 0x4, scoped, tag = 'scoped memory for ffn_forward.1']
    %10 = vsyncpa [#allocation3], 0
    // Predicated region
    $region2: #{ffn_forward.1} parent=1 // pred_check
      _
    $region3: #{ffn_forward.1} parent=1 // pred_check_branch
      %12 = sbr.rel (0) target = $region5
    $region4: #{ffn_forward.1} parent=1 // pred_region
      _
    $region5: #{ffn_forward.1} parent=1 // pred_fallthru
      _
    // Predicated region
    $region6: #{ffn_forward.1} parent=1 // pred_check
      _
    $region7: #{ffn_forward.1} parent=1 // pred_check_branch
      %14 = sbr.rel (0) target = $region9
    $region8: #{ffn_forward.1} parent=1 // pred_region
      _
    $region9: #{ffn_forward.1} parent=1 // pred_fallthru
      _
    // Predicated region
    $region10: #{ffn_forward.1} parent=1 // pred_check
      _
    $region11: #{ffn_forward.1} parent=1 // pred_check_branch
      %16 = sbr.rel (0) target = $region13
    $region12: #{ffn_forward.1} parent=1 // pred_region
      _
    $region13: #{ffn_forward.1} parent=1 // pred_fallthru
      _
    // Predicated region
    $region14: #{ffn_forward.1} parent=1 // pred_check
      _
    $region15: #{ffn_forward.1} parent=1 // pred_check_branch
      %18 = sbr.rel (0) target = $region17
    $region16: #{ffn_forward.1} parent=1 // pred_region
      _
    $region17: #{ffn_forward.1} parent=1 // pred_fallthru
      _
    // Predicated region
    $region18: #{ffn_forward.1} parent=1 // pred_check
      _
    $region19: #{ffn_forward.1} parent=1 // pred_check_branch
      %20 = sbr.rel (0) target = $region21
    $region20: #{ffn_forward.1} parent=1 // pred_region
      _
    $region21: #{ffn_forward.1} parent=1 // pred_fallthru
      _
    %v21 = vld [vmem:[%s0] sm:$0xff]
    %v22 = vld [vmem:[%s0 + $0x8] sm:$0xff]
    %v23 = vld [vmem:[%s1] sm:$0xff]
    %v24 = vld [vmem:[%s1 + $0x8] sm:$0xff]
    %v25 = vld [vmem:[%s1 + $0x10] sm:$0xff]
    %v26 = vld [vmem:[%s1 + $0x18] sm:$0xff]
    %v27 = vld [vmem:[%s2] sm:$0x1]
    %v29 = vperm.slane %v27, 0
    %vm31 = vcmask 261120
    %v33 = vsel %vm31, %v21, 0
    %v36 = vsel %vm31, %v22, 0
    %38 = vmatpush.msra.mxu0 0.0
    %39 = vmatpush.msra.mxu0 0.0
    %40 = vmatpush.msra.mxu0 0.0
    %41 = vmatpush.msra.mxu0 0.0
    %42 = vmatpush.msra.mxu0 0.0
    %43 = vmatpush.msra.mxu0 0.0
    %44 = vmatpush.msra.mxu0 0.0
    %45 = vmatpush.msra.mxu0 0.0
    %46 = vmatpush.msra.mxu0 0.0
    %47 = vmatpush.msra.mxu0 0.0
    %48 = vmatpush.msra.mxu0 0.0
    %49 = vmatpush.msra.mxu0 0.0
    %50 = vmatpush.msra.mxu0 %v26
    %51 = vmatpush.msra.mxu0 %v25
    %52 = vmatpush.msra.mxu0 %v24
    %53 = vmatpush.msra.mxu0 %v23
    %54 = vmatmul.f32.gmra.mxu0 %v33
    %v55 = vpop.f32.mrf.mxu0
    %v56 = vadd.f32 %v29, %v55
    %57 = vmatmul.f32.gmra.mxu0 %v36
    %v58 = vpop.f32.mrf.mxu0
    %v59 = vadd.f32 %v29, %v58
    %60 = vdwg.mxu0
    %v61 = vmax.f32 %v56, 0.0
    %v62 = vmax.f32 %v59, 0.0
    %v63 = vld [vmem:[%s3] sm:$0xff]
    %v64 = vld [vmem:[%s3 + $0x8] sm:$0xff]
    %v65 = vld [vmem:[%s3 + $0x10] sm:$0xff]
    %v66 = vld [vmem:[%s3 + $0x18] sm:$0xff]
    %v67 = vld [vmem:[%s3 + $0x20] sm:$0xff]
    %v68 = vld [vmem:[%s3 + $0x28] sm:$0xff]
    %v69 = vld [vmem:[%s3 + $0x30] sm:$0xff]
    %v70 = vld [vmem:[%s3 + $0x38] sm:$0xff]
    %v71 = vld [vmem:[%s4] sm:$0x1]
    %v73 = vperm.slane %v71, 0
    %vm75 = vcmask 523264
    %v77 = vsel %vm75, %v61, 0
    %v80 = vsel %vm75, %v62, 0
    %82 = vmatpush.msra.mxu0 0.0
    %83 = vmatpush.msra.mxu0 0.0
    %84 = vmatpush.msra.mxu0 0.0
    %85 = vmatpush.msra.mxu0 0.0
    %86 = vmatpush.msra.mxu0 0.0
    %87 = vmatpush.msra.mxu0 0.0
    %88 = vmatpush.msra.mxu0 0.0
    %89 = vmatpush.msra.mxu0 0.0
    %90 = vmatpush.msra.mxu0 %v70
    %91 = vmatpush.msra.mxu0 %v69
    %92 = vmatpush.msra.mxu0 %v68
    %93 = vmatpush.msra.mxu0 %v67
    %94 = vmatpush.msra.mxu0 %v66
    %95 = vmatpush.msra.mxu0 %v65
    %96 = vmatpush.msra.mxu0 %v64
    %97 = vmatpush.msra.mxu0 %v63
    %98 = vmatmul.f32.gmra.mxu0 %v77
    %v99 = vpop.f32.mrf.mxu0
    %v100 = vadd.f32 %v73, %v99
    %101 = vmatmul.f32.gmra.mxu0 %v80
    %v102 = vpop.f32.mrf.mxu0
    %v103 = vadd.f32 %v73, %v102
    %104 = vdwg.mxu0
    %v105 = vmax.f32 %v100, 0.0
    %v106 = vmax.f32 %v103, 0.0
    %107 = vst.msk [vmem:[#allocation2] sm:$0xff] %vm31, %v105
    %108 = vst.msk [vmem:[#allocation2 + $0x8] sm:$0xff] %vm31, %v106
    // Predicated region
    $region22: #{ffn_forward.1} parent=1 // pred_check
      _
    $region23: #{ffn_forward.1} parent=1 // pred_check_branch
      %110 = sbr.rel (0) target = $region25
    $region24: #{ffn_forward.1} parent=1 // pred_region
      %112 = vsyncadd [#allocation3], 0
      %s113 = sshll.u32 [#allocation2], 4
      %s114 = int_to_ptr.vmem [resolvable:$true] %s113
      %s115 = sshll.u32 %s5, 4
      %s116 = int_to_ptr.hbm [resolvable:$true] %s115
      %121 = dma.vmem_to_hbm [thread:$0]  %s114, 256, %s116, [#allocation3], 128, 128, 8
    $region25: #{ffn_forward.1} parent=1 // pred_fallthru
      _
    // Predicated region
    $region26: #{ffn_forward.1} parent=1 // pred_check
      _
    $region27: #{ffn_forward.1} parent=1 // pred_check_branch
      %123 = sbr.rel (0) target = $region29
    $region28: #{ffn_forward.1} parent=1 // pred_region
      %125 = dma.done [#allocation3], 256
    $region29: #{ffn_forward.1} parent=1 // pred_fallthru
      _
    %126 = vsyncpa [#allocation3], 1

</llo_original>
